<compile_context>
chip_gen: v7x
topology: tpu7x:2x2x1
jax: 0.10.0
libtpu: 0.0.40
codegen_flags: <defaults>
</compile_context>

<pallas_src>
import functools

import jax
import jax.numpy as jnp
from jax.experimental import pallas as pl
from jax.experimental.pallas import tpu as pltpu


def _round_up(n, m):
    return (n + m - 1) // m * m


def _context_measurement_kernel(x_ref, w1_ref, b1_ref, w2_ref, b2_ref, o_ref,
                                *, nc_pad, nc_true, inv_nc):
    # x_ref block: (TB * NC_pad, D_pad) bf16 rows for TB batch items.
    rows = x_ref[...]

    # FC1 + ReLU: bf16 operands on the MXU, f32 accumulation, f32 bias/ReLU.
    h = jnp.dot(rows, w1_ref[...], preferred_element_type=jnp.float32)
    h = jnp.maximum(h + b1_ref[...], 0.0)                     # (TB*NC_pad, H_pad) f32

    # FC2 + ReLU: recast activation to bf16 for the second MXU pass.
    y = jnp.dot(h.astype(w2_ref.dtype), w2_ref[...],
                preferred_element_type=jnp.float32)
    y = jnp.maximum(y + b2_ref[...], 0.0)                     # (TB*NC_pad, H_pad) f32

    # Fused _aggregate: per-batch mean over the context axis.
    tb = o_ref.shape[0]
    y = y.reshape(tb, nc_pad, y.shape[-1])                    # layout-preserving: nc_pad % 8 == 0
    if nc_pad != nc_true:
        # Padded context rows went through the MLP with a nonzero bias -> mask them out.
        ctx = jax.lax.broadcasted_iota(jnp.int32, (1, nc_pad, 1), 1)
        y = jnp.where(ctx < nc_true, y, 0.0)
    o_ref[...] = (jnp.sum(y, axis=1) * inv_nc).astype(o_ref.dtype)   # dense (TB, H_pad) store


def _const_spec(shape):
    """BlockSpec for operands whose block never changes across the grid.

    Buffered(1) avoids reserving a useless second pipeline buffer; fall back to the
    default spec if this JAX build does not support pipeline_mode / Buffered.
    """
    index_map = lambda i: (0, 0)
    try:
        return pl.BlockSpec(shape, index_map, pipeline_mode=pl.Buffered(buffer_count=1))
    except (TypeError, AttributeError):
        return pl.BlockSpec(shape, index_map)


def _choose_tb(b, nc_pad, d_pad, h_pad, *, vmem_budget_bytes=12 << 20, max_rows=2048):
    """Batch items per grid step, sized in VMEM bytes (portable across v5e/v6e/v7x)."""
    # Per flattened row: double-buffered bf16 x tile + f32 h/y intermediates.
    bytes_per_row = 2 * d_pad * 2 + 2 * h_pad * 4
    rows_cap = min(max_rows, max(nc_pad, vmem_budget_bytes // bytes_per_row))
    tb_cap = max(1, rows_cap // nc_pad)
    if b <= 8:
        return b                                    # single step; block == full batch dim
    tb = max(8, (min(tb_cap, b) // 8) * 8)          # sublane-legal partial blocks
    if tb * 2 > b:                                  # keep >= 2 steps so both v7x TCs work
        tb = max(8, ((b // 2) // 8) * 8)
    return tb


def context_measurement_module(x, w1, b1, w2, b2, *, compute_dtype=jnp.bfloat16):
    """x: (B, NC, D_in) f32; w1: (D_in, H); b1: (1, H); w2: (H, H); b2: (1, H) -> (B, H) f32."""
    B, NC, D_in = x.shape
    H = w2.shape[1]

    # Lane / sublane padding for dense vregs and unmasked stores.
    D_pad = _round_up(D_in, 128)
    H_pad = _round_up(H, 128)
    NC_pad = _round_up(NC, 8)

    tb = _choose_tb(B, NC_pad, D_pad, H_pad)
    steps = pl.cdiv(B, tb)
    B_pad = steps * tb
    tile_rows = tb * NC_pad

    itemsize = jnp.dtype(compute_dtype).itemsize

    # Zero-pad + flatten once in the wrapper; cast MXU operands to bf16.
    x_p = jnp.pad(x, ((0, B_pad - B), (0, NC_pad - NC), (0, D_pad - D_in)))
    x_flat = x_p.reshape(B_pad * NC_pad, D_pad).astype(compute_dtype)
    w1_p = jnp.pad(w1, ((0, D_pad - D_in), (0, H_pad - H))).astype(compute_dtype)
    w2_p = jnp.pad(w2, ((0, H_pad - H), (0, H_pad - H))).astype(compute_dtype)
    b1_p = jnp.pad(b1, ((0, 0), (0, H_pad - H))).astype(jnp.float32)
    b2_p = jnp.pad(b2, ((0, 0), (0, H_pad - H))).astype(jnp.float32)

    kernel = functools.partial(
        _context_measurement_kernel,
        nc_pad=NC_pad, nc_true=NC, inv_nc=float(1.0 / NC))   # plain Python scalars only

    total_rows = B_pad * NC_pad
    cost = pl.CostEstimate(
        flops=2 * total_rows * (D_pad * H_pad + H_pad * H_pad),
        transcendentals=0,
        bytes_accessed=(total_rows * D_pad * itemsize
                        + (D_pad * H_pad + H_pad * H_pad) * itemsize
                        + 2 * H_pad * 4
                        + B_pad * H_pad * 4),
    )

    out = pl.pallas_call(
        kernel,
        out_shape=jax.ShapeDtypeStruct((B_pad, H_pad), jnp.float32),
        grid=(steps,),
        in_specs=[
            pl.BlockSpec((tile_rows, D_pad), lambda i: (i, 0)),  # x rows for this tile
            _const_spec((D_pad, H_pad)),                         # W1 (VMEM-resident, 1 buffer)
            _const_spec((1, H_pad)),                             # b1
            _const_spec((H_pad, H_pad)),                         # W2
            _const_spec((1, H_pad)),                             # b2
        ],
        out_specs=pl.BlockSpec((tb, H_pad), lambda i: (i, 0)),   # dense (TB, H_pad) slab
        compiler_params=pltpu.CompilerParams(
            dimension_semantics=("parallel",)),
        cost_estimate=cost,
    )(x_flat, w1_p, b1_p, w2_p, b2_p)

    return out[:B, :H]


def reference_forward(x, w1, b1, w2, b2, compute_dtype=jnp.bfloat16):
    """Pure-JAX reference mirroring the PyTorch module (same bf16-matmul numerics)."""
    B, NC, D = x.shape
    flat = x.reshape(B * NC, D)
    h = jnp.maximum(
        jnp.dot(flat.astype(compute_dtype), w1.astype(compute_dtype),
                preferred_element_type=jnp.float32) + b1[0], 0.0)
    y = jnp.maximum(
        jnp.dot(h.astype(compute_dtype), w2.astype(compute_dtype),
                preferred_element_type=jnp.float32) + b2[0], 0.0)
    return jnp.mean(y.reshape(B, NC, -1), axis=1)


if __name__ == "__main__":
    # Small shapes consistent with the module's forward:
    #   x: (batch_size=2, num_context=8, vector_len=32), hidden=32
    B, NC, D_in, H = 2, 8, 32, 32

    key = jax.random.PRNGKey(0)
    kx, k1, k2, k3, k4 = jax.random.split(key, 5)

    x = jax.random.normal(kx, (B, NC, D_in), dtype=jnp.float32)

    # Deterministic parameter init for the "full_connected_model"
    # (Linear(D_in, H) -> ReLU -> Linear(H, H) -> ReLU)
    w1 = jax.random.normal(k1, (D_in, H), dtype=jnp.float32) * (1.0 / jnp.sqrt(D_in))
    b1 = jax.random.normal(k2, (1, H), dtype=jnp.float32) * 0.01
    w2 = jax.random.normal(k3, (H, H), dtype=jnp.float32) * (1.0 / jnp.sqrt(H))
    b2 = jax.random.normal(k4, (1, H), dtype=jnp.float32) * 0.01

    out = jax.block_until_ready(context_measurement_module(x, w1, b1, w2, b2))
    assert out.shape == (B, H), out.shape

    # Same-numerics (bf16 matmul) reference: should match tightly.
    ref = reference_forward(x, w1, b1, w2, b2)
    assert jnp.allclose(out, ref, atol=2e-2, rtol=2e-2), "mismatch vs bf16 reference"
    # Loose sanity check against a full-f32 reference.
    ref32 = reference_forward(x, w1, b1, w2, b2, compute_dtype=jnp.float32)
    assert jnp.allclose(out, ref32, atol=1e-1, rtol=1e-1), "mismatch vs f32 reference"

    print("KERNEL_OK")
</pallas_src>

<mosaic_0001>
module attributes {stable_mosaic.version = 11 : i64} {
  func.func @_context_measurement_kernel(%arg0: i32, %arg1: memref<16x128xbf16, #tpu.memory_space<vmem>>, %arg2: memref<128x128xbf16, #tpu.memory_space<vmem>>, %arg3: memref<1x128xf32, #tpu.memory_space<vmem>>, %arg4: memref<128x128xbf16, #tpu.memory_space<vmem>>, %arg5: memref<1x128xf32, #tpu.memory_space<vmem>>, %arg6: memref<2x128xf32, #tpu.memory_space<vmem>>) attributes {dimension_semantics = [#tpu.dimension_semantics<parallel>], iteration_bounds = array<i64: 1>, scalar_prefetch = 0 : i64, scratch_operands = 0 : i64, tpu.core_type = #tpu.core_type<tc>, window_params = [{transform_indices = @transform_0, window_bounds = array<i64: 16, 128>}, {pipeline_mode = #tpu.pipeline_mode<synchronous>, transform_indices = @transform_1, window_bounds = array<i64: 128, 128>}, {pipeline_mode = #tpu.pipeline_mode<synchronous>, transform_indices = @transform_2, window_bounds = array<i64: 1, 128>}, {pipeline_mode = #tpu.pipeline_mode<synchronous>, transform_indices = @transform_3, window_bounds = array<i64: 128, 128>}, {pipeline_mode = #tpu.pipeline_mode<synchronous>, transform_indices = @transform_4, window_bounds = array<i64: 1, 128>}, {transform_indices = @transform_5, window_bounds = array<i64: 2, 128>}]} {
    %c0 = arith.constant 0 : index
    %c0_0 = arith.constant 0 : index
    %0 = vector.load %arg1[%c0, %c0_0] : memref<16x128xbf16, #tpu.memory_space<vmem>>, vector<16x128xbf16>
    %c0_1 = arith.constant 0 : index
    %c0_2 = arith.constant 0 : index
    %1 = vector.load %arg2[%c0_1, %c0_2] : memref<128x128xbf16, #tpu.memory_space<vmem>>, vector<128x128xbf16>
    %cst = arith.constant dense<0.000000e+00> : vector<16x128xf32>
    %2 = tpu.matmul %0, %1, %cst {dimension_numbers = #tpu.dot_dimension_numbers<[1], [0], [0], [1], [0, 0, 1, 1], [], []>} : vector<16x128xbf16>, vector<128x128xbf16>, vector<16x128xf32> -> vector<16x128xf32>
    %c0_3 = arith.constant 0 : index
    %c0_4 = arith.constant 0 : index
    %3 = vector.load %arg3[%c0_3, %c0_4] : memref<1x128xf32, #tpu.memory_space<vmem>>, vector<1x128xf32>
    %4 = vector.broadcast %3 : vector<1x128xf32> to vector<16x128xf32>
    %5 = arith.addf %2, %4 : vector<16x128xf32>
    %cst_5 = arith.constant 0.000000e+00 : f32
    %6 = vector.broadcast %cst_5 : f32 to vector<16x128xf32>
    %7 = arith.maximumf %5, %6 : vector<16x128xf32>
    %8 = arith.truncf %7 : vector<16x128xf32> to vector<16x128xbf16>
    %c0_6 = arith.constant 0 : index
    %c0_7 = arith.constant 0 : index
    %9 = vector.load %arg4[%c0_6, %c0_7] : memref<128x128xbf16, #tpu.memory_space<vmem>>, vector<128x128xbf16>
    %cst_8 = arith.constant dense<0.000000e+00> : vector<16x128xf32>
    %10 = tpu.matmul %8, %9, %cst_8 {dimension_numbers = #tpu.dot_dimension_numbers<[1], [0], [0], [1], [0, 0, 1, 1], [], []>} : vector<16x128xbf16>, vector<128x128xbf16>, vector<16x128xf32> -> vector<16x128xf32>
    %c0_9 = arith.constant 0 : index
    %c0_10 = arith.constant 0 : index
    %11 = vector.load %arg5[%c0_9, %c0_10] : memref<1x128xf32, #tpu.memory_space<vmem>>, vector<1x128xf32>
    %12 = vector.broadcast %11 : vector<1x128xf32> to vector<16x128xf32>
    %13 = arith.addf %10, %12 : vector<16x128xf32>
    %cst_11 = arith.constant 0.000000e+00 : f32
    %14 = vector.broadcast %cst_11 : f32 to vector<16x128xf32>
    %15 = arith.maximumf %13, %14 : vector<16x128xf32>
    %16 = vector.shape_cast %15 : vector<16x128xf32> to vector<2x8x128xf32>
    %cst_12 = arith.constant dense<0.000000e+00> : vector<2x128xf32>
    %17 = vector.multi_reduction <add>, %16, %cst_12 [1] : vector<2x8x128xf32> to vector<2x128xf32>
    %cst_13 = arith.constant 1.250000e-01 : f32
    %18 = vector.broadcast %cst_13 : f32 to vector<2x128xf32>
    %19 = arith.mulf %17, %18 : vector<2x128xf32>
    %c0_14 = arith.constant 0 : index
    %c0_15 = arith.constant 0 : index
    %20 = vector.load %arg6[%c0_14, %c0_15] : memref<2x128xf32, #tpu.memory_space<vmem>>, vector<2x128xf32>
    tpu.vector_store %arg6[%c0_14, %c0_15], %19 {strides = array<i32>} : memref<2x128xf32, #tpu.memory_space<vmem>>, vector<2x128xf32>,
    return
  }
  func.func @transform_0(%arg0: i32) -> (i32, i32) {
    %c0_i32 = arith.constant 0 : i32
    %c0_i32_0 = arith.constant 0 : i32
    return %arg0, %c0_i32 : i32, i32
  }
  func.func @transform_1(%arg0: i32) -> (i32, i32) {
    %c0_i32 = arith.constant 0 : i32
    %c0_i32_0 = arith.constant 0 : i32
    %c0_i32_1 = arith.constant 0 : i32
    return %c0_i32, %c0_i32_0 : i32, i32
  }
  func.func @transform_2(%arg0: i32) -> (i32, i32) {
    %c0_i32 = arith.constant 0 : i32
    %c0_i32_0 = arith.constant 0 : i32
    %c0_i32_1 = arith.constant 0 : i32
    return %c0_i32, %c0_i32_0 : i32, i32
  }
  func.func @transform_3(%arg0: i32) -> (i32, i32) {
    %c0_i32 = arith.constant 0 : i32
    %c0_i32_0 = arith.constant 0 : i32
    %c0_i32_1 = arith.constant 0 : i32
    return %c0_i32, %c0_i32_0 : i32, i32
  }
  func.func @transform_4(%arg0: i32) -> (i32, i32) {
    %c0_i32 = arith.constant 0 : i32
    %c0_i32_0 = arith.constant 0 : i32
    %c0_i32_1 = arith.constant 0 : i32
    return %c0_i32, %c0_i32_0 : i32, i32
  }
  func.func @transform_5(%arg0: i32) -> (i32, i32) {
    %c0_i32 = arith.constant 0 : i32
    %c0_i32_0 = arith.constant 0 : i32
    return %arg0, %c0_i32 : i32, i32
  }
}

</mosaic_0001>

<llo_original>
// kernel: tpu_custom_call.1
$region0: #{tpu_custom_call.1}
  #allocation0 [shape = 'u32[]', space=smem, size = 0x4, offset = 0x4, fixed_abs, tag = 'smem constant byte address 0x4 - core index']
  #allocation1 [shape = 'u32[144,128]{1,0:T(1,128)}', space=vmem, size = 0x12000, scoped, tag = 'internal scratch']
  %s0 = inlined_call_operand.hbm [shape: bf16[16,128], index: 0, kind: input, shape index: {}]
  %s1 = inlined_call_operand.hbm [shape: bf16[128,128], index: 1, kind: input, shape index: {}]
  %s2 = inlined_call_operand.vmem [shape: f32[1,128], index: 2, kind: input, shape index: {}]
  %s3 = inlined_call_operand.hbm [shape: bf16[128,128], index: 3, kind: input, shape index: {}]
  %s4 = inlined_call_operand.vmem [shape: f32[1,128], index: 4, kind: input, shape index: {}]
  %s5 = inlined_call_operand.hbm [shape: f32[2,128], index: 5, kind: output, shape index: {}]
  %s6 = sld [smem:[#allocation0]]
  $region42: #{tpu_custom_call.1} parent=0
    _
  %s8 = ssub.s32 1, %s6
  %s9 = scalar_select 0, %s8, %s6
  $region1: #{tpu_custom_call.1} parent=0
    #allocation2 [shape = 'u8[4096]{0}', space=vmem, size = 0x1000, scoped, tag = 'input window, operand 0, single buffered']
    #allocation3 [shape = 's32[1]{0}', space=sflag, size = 0x4, scoped, tag = 'scoped memory for tpu_custom_call.1']
    #allocation4 [shape = 's32[1]{0}', space=sflag, size = 0x4, scoped, tag = 'scoped memory for tpu_custom_call.1']
    #allocation5 [shape = 'u8[32768]{0}', space=vmem, size = 0x8000, scoped, tag = 'input window, operand 1, single buffered']
    #allocation6 [shape = 's32[1]{0}', space=sflag, size = 0x4, scoped, tag = 'scoped memory for tpu_custom_call.1']
    #allocation7 [shape = 'u8[32768]{0}', space=vmem, size = 0x8000, scoped, tag = 'input window, operand 3, single buffered']
    #allocation8 [shape = 'u8[1024]{0}', space=vmem, size = 0x400, scoped, tag = 'output window, operand 0, single buffered']
    %10 = vsyncpa [#allocation3], 0
    %11 = vsyncpa [#allocation6], 0
    %12 = vsyncpa [#allocation4], 0
    // Predicated region
    $region2: #{tpu_custom_call.1} parent=1 // pred_check
      _
    $region3: #{tpu_custom_call.1} parent=1 // pred_check_branch
      %14 = sbr.rel (0) target = $region5
    $region4: #{tpu_custom_call.1} parent=1 // pred_region
      %s16 = ssub.s32 128, 128
      %17 = vsyncadd [#allocation3], %s16
      %s18 = sshll.u32 [#allocation2], 4
      %s19 = int_to_ptr.vmem [resolvable:$true] %s18
      %24 = dma.hbm_to_vmem [thread:$0]  %s0, 128, %s19, [#allocation3], 64, 64, 4
    $region5: #{tpu_custom_call.1} parent=1 // pred_fallthru
      _
    // Predicated region
    $region6: #{tpu_custom_call.1} parent=1 // pred_check
      _
    $region7: #{tpu_custom_call.1} parent=1 // pred_check_branch
      %26 = sbr.rel (0) target = $region9
    $region8: #{tpu_custom_call.1} parent=1 // pred_region
      %s28 = ssub.s32 1024, 1024
      %29 = vsyncadd [#allocation6], %s28
      %s30 = sshll.u32 [#allocation5], 4
      %s31 = int_to_ptr.vmem [resolvable:$true] %s30
      %36 = dma.hbm_to_vmem [thread:$0]  %s1, 1024, %s31, [#allocation6], 64, 64, 4
    $region9: #{tpu_custom_call.1} parent=1 // pred_fallthru
      _
    // Predicated region
    $region10: #{tpu_custom_call.1} parent=1 // pred_check
      _
    $region11: #{tpu_custom_call.1} parent=1 // pred_check_branch
      %38 = sbr.rel (0) target = $region13
    $region12: #{tpu_custom_call.1} parent=1 // pred_region
      _
    $region13: #{tpu_custom_call.1} parent=1 // pred_fallthru
      _
    // Predicated region
    $region14: #{tpu_custom_call.1} parent=1 // pred_check
      _
    $region15: #{tpu_custom_call.1} parent=1 // pred_check_branch
      %40 = sbr.rel (0) target = $region17
    $region16: #{tpu_custom_call.1} parent=1 // pred_region
      %s42 = ssub.s32 1024, 1024
      %43 = vsyncadd [#allocation6], %s42
      %s44 = sshll.u32 [#allocation7], 4
      %s45 = int_to_ptr.vmem [resolvable:$true] %s44
      %50 = dma.hbm_to_vmem [thread:$0]  %s3, 1024, %s45, [#allocation6], 64, 64, 4
    $region17: #{tpu_custom_call.1} parent=1 // pred_fallthru
      _
    // Predicated region
    $region18: #{tpu_custom_call.1} parent=1 // pred_check
      _
    $region19: #{tpu_custom_call.1} parent=1 // pred_check_branch
      %52 = sbr.rel (0) target = $region21
    $region20: #{tpu_custom_call.1} parent=1 // pred_region
      _
    $region21: #{tpu_custom_call.1} parent=1 // pred_fallthru
      _
    // Predicated region
    $region22: #{tpu_custom_call.1} parent=1 // pred_check
      _
    $region23: #{tpu_custom_call.1} parent=1 // pred_check_branch
      %54 = sbr.rel (0) target = $region25
    $region24: #{tpu_custom_call.1} parent=1 // pred_region
      %55 = dma.done [#allocation3], 128
    $region25: #{tpu_custom_call.1} parent=1 // pred_fallthru
      _
    // Predicated region
    $region26: #{tpu_custom_call.1} parent=1 // pred_check
      _
    $region27: #{tpu_custom_call.1} parent=1 // pred_check_branch
      %57 = sbr.rel (0) target = $region29
    $region28: #{tpu_custom_call.1} parent=1 // pred_region
      %58 = dma.done [#allocation6], 1024
    $region29: #{tpu_custom_call.1} parent=1 // pred_fallthru
      _
    // Predicated region
    $region30: #{tpu_custom_call.1} parent=1 // pred_check
      _
    $region31: #{tpu_custom_call.1} parent=1 // pred_check_branch
      %60 = sbr.rel (0) target = $region33
    $region32: #{tpu_custom_call.1} parent=1 // pred_region
      %61 = dma.done [#allocation6], 1024
    $region33: #{tpu_custom_call.1} parent=1 // pred_fallthru
      _
    %v63 = vld [vmem:[#allocation2] sm:$0xf]
    %v64 = vld [vmem:[#allocation2 + $0x4] sm:$0xf]
    %v65 = vld [vmem:[#allocation5] sm:$0xf]
    %v66 = vld [vmem:[#allocation5 + $0x4] sm:$0xf]
    %v67 = vld [vmem:[#allocation5 + $0x8] sm:$0xf]
    %v68 = vld [vmem:[#allocation5 + $0xc] sm:$0xf]
    %v69 = vld [vmem:[#allocation5 + $0x10] sm:$0xf]
    %v70 = vld [vmem:[#allocation5 + $0x14] sm:$0xf]
    %v71 = vld [vmem:[#allocation5 + $0x18] sm:$0xf]
    %v72 = vld [vmem:[#allocation5 + $0x1c] sm:$0xf]
    %v73 = vld [vmem:[#allocation5 + $0x20] sm:$0xf]
    %v74 = vld [vmem:[#allocation5 + $0x24] sm:$0xf]
    %v75 = vld [vmem:[#allocation5 + $0x28] sm:$0xf]
    %v76 = vld [vmem:[#allocation5 + $0x2c] sm:$0xf]
    %v77 = vld [vmem:[#allocation5 + $0x30] sm:$0xf]
    %v78 = vld [vmem:[#allocation5 + $0x34] sm:$0xf]
    %v79 = vld [vmem:[#allocation5 + $0x38] sm:$0xf]
    %v80 = vld [vmem:[#allocation5 + $0x3c] sm:$0xf]
    %v81 = vld [vmem:[%s2] sm:$0x1]
    %v83 = vlaneseq
    %v84 = vshrl.u32 %v83, 7
    %v85 = vsub.s32 0, %v84
    %v86 = vrot.slane %v81, %v85
    %v90 = vunpack.c.l.b16 %v63
    %v91 = vunpack.c.l.b16 %v64
    %v92 = vpack.c.b16 %v91, %v90
    %v110 = vunpack.c.l.b16 %v65
    %v111 = vunpack.c.l.b16 %v66
    %v112 = vunpack.c.l.b16 %v67
    %v113 = vunpack.c.l.b16 %v68
    %v114 = vunpack.c.l.b16 %v69
    %v115 = vunpack.c.l.b16 %v70
    %v116 = vunpack.c.l.b16 %v71
    %v117 = vunpack.c.l.b16 %v72
    %v118 = vunpack.c.l.b16 %v73
    %v119 = vunpack.c.l.b16 %v74
    %v120 = vunpack.c.l.b16 %v75
    %v121 = vunpack.c.l.b16 %v76
    %v122 = vunpack.c.l.b16 %v77
    %v123 = vunpack.c.l.b16 %v78
    %v124 = vunpack.c.l.b16 %v79
    %v125 = vunpack.c.l.b16 %v80
    %v126 = vpack.c.b16 %v111, %v110
    %v127 = vpack.c.b16 %v113, %v112
    %v128 = vpack.c.b16 %v115, %v114
    %v129 = vpack.c.b16 %v117, %v116
    %v130 = vpack.c.b16 %v119, %v118
    %v131 = vpack.c.b16 %v121, %v120
    %v132 = vpack.c.b16 %v123, %v122
    %v133 = vpack.c.b16 %v125, %v124
    %142 = vmatprep.subr.bf16.mxu0 0
    %143 = vmatpush1.bf16.msra.mxu0 %v126
    %144 = vmatprep.subr.bf16.mxu0 0
    %145 = vmatpush1.bf16.msra.mxu0 %v127
    %146 = vmatprep.subr.bf16.mxu0 0
    %147 = vmatpush1.bf16.msra.mxu0 %v128
    %148 = vmatprep.subr.bf16.mxu0 0
    %149 = vmatpush1.bf16.msra.mxu0 %v129
    %150 = vmatprep.subr.bf16.mxu0 0
    %151 = vmatpush1.bf16.msra.mxu0 %v130
    %152 = vmatprep.subr.bf16.mxu0 0
    %153 = vmatpush1.bf16.msra.mxu0 %v131
    %154 = vmatprep.subr.bf16.mxu0 0
    %155 = vmatpush1.bf16.msra.mxu0 %v132
    %156 = vmatprep.subr.bf16.mxu0 0
    %157 = vmatpush1.bf16.msra.mxu0 %v133
    %158 = vmatprep.subr.bf16.mxu0 0
    %159 = vmatpush1.bf16.msra.mxu0 0
    %160 = vmatprep.subr.bf16.mxu0 0
    %161 = vmatpush1.bf16.msra.mxu0 0
    %162 = vmatprep.subr.bf16.mxu0 0
    %163 = vmatpush1.bf16.msra.mxu0 0
    %164 = vmatprep.subr.bf16.mxu0 0
    %165 = vmatpush1.bf16.msra.mxu0 0
    %166 = vmatprep.subr.bf16.mxu0 0
    %167 = vmatpush1.bf16.msra.mxu0 0
    %168 = vmatprep.subr.bf16.mxu0 0
    %169 = vmatpush1.bf16.msra.mxu0 0
    %170 = vmatprep.subr.bf16.mxu0 0
    %171 = vmatpush1.bf16.msra.mxu0 0
    %172 = vmatprep.subr.bf16.mxu0 0
    %173 = vmatpush1.bf16.msra.mxu0 0
    %174 = vmatprep.mubr.bf16.mxu0 0
    %175 = vmatmul.mubr.bf16.gmra.mrb[0].mxu0 %v92
    %v176 = vpop.f32.mrb[0].mxu0
    %v177 = vadd.f32 %v86, %v176
    %v178 = vpop.f32.mrb[0].mxu0
    %v179 = vpop.f32.mrb[0].mxu0
    %v180 = vadd.f32 %v86, %v179
    %v181 = vpop.f32.mrb[0].mxu0
    %182 = vdwg.mxu0
    %v183 = vmax.f32 %v177, 0.0
    %v184 = vmax.f32 %v180, 0.0
    %v185 = vpack.c.bf16 %v184, %v183
    %v186 = vld [vmem:[#allocation7] sm:$0xf]
    %v187 = vld [vmem:[#allocation7 + $0x4] sm:$0xf]
    %v188 = vld [vmem:[#allocation7 + $0x8] sm:$0xf]
    %v189 = vld [vmem:[#allocation7 + $0xc] sm:$0xf]
    %v190 = vld [vmem:[#allocation7 + $0x10] sm:$0xf]
    %v191 = vld [vmem:[#allocation7 + $0x14] sm:$0xf]
    %v192 = vld [vmem:[#allocation7 + $0x18] sm:$0xf]
    %v193 = vld [vmem:[#allocation7 + $0x1c] sm:$0xf]
    %v194 = vld [vmem:[#allocation7 + $0x20] sm:$0xf]
    %v195 = vld [vmem:[#allocation7 + $0x24] sm:$0xf]
    %v196 = vld [vmem:[#allocation7 + $0x28] sm:$0xf]
    %v197 = vld [vmem:[#allocation7 + $0x2c] sm:$0xf]
    %v198 = vld [vmem:[#allocation7 + $0x30] sm:$0xf]
    %v199 = vld [vmem:[#allocation7 + $0x34] sm:$0xf]
    %v200 = vld [vmem:[#allocation7 + $0x38] sm:$0xf]
    %v201 = vld [vmem:[#allocation7 + $0x3c] sm:$0xf]
    %v202 = vld [vmem:[%s4] sm:$0x1]
    %v204 = vlaneseq
    %v205 = vshrl.u32 %v204, 7
    %v206 = vsub.s32 0, %v205
    %v207 = vrot.slane %v202, %v206
    %v225 = vunpack.c.l.b16 %v186
    %v226 = vunpack.c.l.b16 %v187
    %v227 = vunpack.c.l.b16 %v188
    %v228 = vunpack.c.l.b16 %v189
    %v229 = vunpack.c.l.b16 %v190
    %v230 = vunpack.c.l.b16 %v191
    %v231 = vunpack.c.l.b16 %v192
    %v232 = vunpack.c.l.b16 %v193
    %v233 = vunpack.c.l.b16 %v194
    %v234 = vunpack.c.l.b16 %v195
    %v235 = vunpack.c.l.b16 %v196
    %v236 = vunpack.c.l.b16 %v197
    %v237 = vunpack.c.l.b16 %v198
    %v238 = vunpack.c.l.b16 %v199
    %v239 = vunpack.c.l.b16 %v200
    %v240 = vunpack.c.l.b16 %v201
    %v241 = vpack.c.b16 %v226, %v225
    %v242 = vpack.c.b16 %v228, %v227
    %v243 = vpack.c.b16 %v230, %v229
    %v244 = vpack.c.b16 %v232, %v231
    %v245 = vpack.c.b16 %v234, %v233
    %v246 = vpack.c.b16 %v236, %v235
    %v247 = vpack.c.b16 %v238, %v237
    %v248 = vpack.c.b16 %v240, %v239
    %257 = vmatprep.subr.bf16.mxu0 0
    %258 = vmatpush1.bf16.msra.mxu0 %v241
    %259 = vmatprep.subr.bf16.mxu0 0
    %260 = vmatpush1.bf16.msra.mxu0 %v242
    %261 = vmatprep.subr.bf16.mxu0 0
    %262 = vmatpush1.bf16.msra.mxu0 %v243
    %263 = vmatprep.subr.bf16.mxu0 0
    %264 = vmatpush1.bf16.msra.mxu0 %v244
    %265 = vmatprep.subr.bf16.mxu0 0
    %266 = vmatpush1.bf16.msra.mxu0 %v245
    %267 = vmatprep.subr.bf16.mxu0 0
    %268 = vmatpush1.bf16.msra.mxu0 %v246
    %269 = vmatprep.subr.bf16.mxu0 0
    %270 = vmatpush1.bf16.msra.mxu0 %v247
    %271 = vmatprep.subr.bf16.mxu0 0
    %272 = vmatpush1.bf16.msra.mxu0 %v248
    %273 = vmatprep.subr.bf16.mxu0 0
    %274 = vmatpush1.bf16.msra.mxu0 0
    %275 = vmatprep.subr.bf16.mxu0 0
    %276 = vmatpush1.bf16.msra.mxu0 0
    %277 = vmatprep.subr.bf16.mxu0 0
    %278 = vmatpush1.bf16.msra.mxu0 0
    %279 = vmatprep.subr.bf16.mxu0 0
    %280 = vmatpush1.bf16.msra.mxu0 0
    %281 = vmatprep.subr.bf16.mxu0 0
    %282 = vmatpush1.bf16.msra.mxu0 0
    %283 = vmatprep.subr.bf16.mxu0 0
    %284 = vmatpush1.bf16.msra.mxu0 0
    %285 = vmatprep.subr.bf16.mxu0 0
    %286 = vmatpush1.bf16.msra.mxu0 0
    %287 = vmatprep.subr.bf16.mxu0 0
    %288 = vmatpush1.bf16.msra.mxu0 0
    %289 = vmatprep.mubr.bf16.mxu0 0
    %290 = vmatmul.mubr.bf16.gmra.mrb[0].mxu0 %v185
    %v291 = vpop.f32.mrb[0].mxu0
    %v292 = vadd.f32 %v207, %v291
    %v293 = vpop.f32.mrb[0].mxu0
    %v294 = vpop.f32.mrb[0].mxu0
    %v295 = vadd.f32 %v207, %v294
    %v296 = vpop.f32.mrb[0].mxu0
    %297 = vdwg.mxu0
    %v298 = vmax.f32 %v292, 0.0
    %v299 = vmax.f32 %v295, 0.0
    %v300 = vrot.slane %v298, 4
    %v301 = vadd.f32 %v298, %v300
    %v302 = vrot.slane %v301, 2
    %v303 = vadd.f32 %v301, %v302
    %v304 = vrot.slane %v303, 1
    %v305 = vadd.f32 %v303, %v304
    %v306 = vrot.slane %v299, 4
    %v307 = vadd.f32 %v299, %v306
    %v308 = vrot.slane %v307, 2
    %v309 = vadd.f32 %v307, %v308
    %v310 = vrot.slane %v309, 1
    %v311 = vadd.f32 %v309, %v310
    %v312 = vmul.f32 %v305, 0.125
    %v313 = vmul.f32 %v311, 0.125
    %vm316 = vcmask 1041409
    %v317 = vsel %vm316, %v313, %v312
    %319 = vst [vmem:[#allocation8] sm:$0x3] %v317
    // Predicated region
    $region34: #{tpu_custom_call.1} parent=1 // pred_check
      _
    $region35: #{tpu_custom_call.1} parent=1 // pred_check_branch
      %321 = sbr.rel (0) target = $region37
    $region36: #{tpu_custom_call.1} parent=1 // pred_region
      %s323 = ssub.s32 32, 32
      %324 = vsyncadd [#allocation4], %s323
      %s326 = sshll.u32 [#allocation8], 4
      %s327 = int_to_ptr.vmem [resolvable:$true] %s326
      %329 = dma.vmem_to_hbm [thread:$0]  %s327, 32, %s5, [#allocation4]
    $region37: #{tpu_custom_call.1} parent=1 // pred_fallthru
      _
    // Predicated region
    $region38: #{tpu_custom_call.1} parent=1 // pred_check
      _
    $region39: #{tpu_custom_call.1} parent=1 // pred_check_branch
      %331 = sbr.rel (0) target = $region41
    $region40: #{tpu_custom_call.1} parent=1 // pred_region
      %332 = dma.done [#allocation4], 32
    $region41: #{tpu_custom_call.1} parent=1 // pred_fallthru
      _
    %333 = vsyncpa [#allocation3], 1
    %334 = vsyncpa [#allocation6], 1
    %335 = vsyncpa [#allocation4], 1

</llo_original>
